<compile_context>
chip_gen: v7x
topology: tpu7x:2x2x1
jax: 0.10.0
libtpu: 0.0.40
codegen_flags: <defaults>
</compile_context>

<pallas_src>
import jax
import jax.numpy as jnp
from jax.experimental import pallas as pl
from jax.experimental.pallas import tpu as pltpu

LANE = 128          # lane width: pad s_dim / a_dim to this
DEFAULT_TB = 256    # batch tile (rows per grid step)


def _round_up(n, m):
    return ((n + m - 1) // m) * m


def anet_kernel(x_ref,
                w1_ref, b1_ref,
                w2_ref, b2_ref,
                w3_ref, b3_ref,
                w4_ref, b4_ref,
                o_ref):
    # fc1 + relu   (bf16 operands, f32 accumulate; bias/relu in f32)
    h = jnp.dot(x_ref[...].astype(jnp.bfloat16), w1_ref[...],
                preferred_element_type=jnp.float32) + b1_ref[...]
    h = jnp.maximum(h, 0.0)

    # fc2 + relu
    h = jnp.dot(h.astype(jnp.bfloat16), w2_ref[...],
                preferred_element_type=jnp.float32) + b2_ref[...]
    h = jnp.maximum(h, 0.0)

    # fc7 + relu
    h = jnp.dot(h.astype(jnp.bfloat16), w3_ref[...],
                preferred_element_type=jnp.float32) + b3_ref[...]
    h = jnp.maximum(h, 0.0)

    # out + tanh (output columns beyond a_dim are zero-padded -> tanh(0)=0)
    h = jnp.dot(h.astype(jnp.bfloat16), w4_ref[...],
                preferred_element_type=jnp.float32) + b4_ref[...]
    o_ref[...] = jnp.tanh(h).astype(o_ref.dtype)


def anet_forward(x, params, *, tb=DEFAULT_TB):
    """x: (B, s_dim) f32. params: dict of (in,out) f32 weights, (1,out) f32 biases.

    Returns (B, a_dim) f32 actions in [-1, 1].
    """
    B, s_dim = x.shape
    a_dim = params["w4"].shape[1]

    # --- batch tiling (pad B up; small batches get a single tile) ---
    tb_eff = _round_up(B, 8) if B <= tb else tb
    b_pad = _round_up(B, tb_eff)
    grid = (b_pad // tb_eff,)

    # --- lane-dense padding of x / first & last layers ---
    x_p = jnp.pad(x, ((0, b_pad - B), (0, LANE - s_dim)))

    w1 = jnp.pad(params["w1"], ((0, LANE - s_dim), (0, 0))).astype(jnp.bfloat16)
    w2 = params["w2"].astype(jnp.bfloat16)
    w3 = params["w3"].astype(jnp.bfloat16)
    w4 = jnp.pad(params["w4"], ((0, 0), (0, LANE - a_dim))).astype(jnp.bfloat16)
    b1 = params["b1"]
    b2 = params["b2"]
    b3 = params["b3"]
    b4 = jnp.pad(params["b4"], ((0, 0), (0, LANE - a_dim)))

    def resident(shape):
        # weights/biases: same block every grid step -> stay in VMEM
        return pl.BlockSpec(shape, lambda i: (0, 0))

    out_padded = pl.pallas_call(
        anet_kernel,
        out_shape=jax.ShapeDtypeStruct((b_pad, LANE), jnp.float32),
        grid=grid,
        in_specs=[
            pl.BlockSpec((tb_eff, LANE), lambda i: (i, 0)),   # x tile
            resident(w1.shape), resident(b1.shape),
            resident(w2.shape), resident(b2.shape),
            resident(w3.shape), resident(b3.shape),
            resident(w4.shape), resident(b4.shape),
        ],
        out_specs=pl.BlockSpec((tb_eff, LANE), lambda i: (i, 0)),
        compiler_params=pltpu.CompilerParams(
            dimension_semantics=("parallel",)),
    )(x_p, w1, b1, w2, b2, w3, b3, w4, b4)

    return out_padded[:B, :a_dim]


def init_params(key, s_dim, a_dim):
    """PyTorch nn.Linear default init: U(-1/sqrt(fan_in), 1/sqrt(fan_in)).
    Weights stored transposed vs PyTorch, i.e. (in_features, out_features)."""
    dims = [(s_dim, 128), (128, 256), (256, 128), (128, a_dim)]
    params = {}
    for i, (fin, fout) in enumerate(dims, start=1):
        key, kw, kb = jax.random.split(key, 3)
        bound = 1.0 / jnp.sqrt(jnp.float32(fin))
        params[f"w{i}"] = jax.random.uniform(
            kw, (fin, fout), jnp.float32, minval=-bound, maxval=bound)
        params[f"b{i}"] = jax.random.uniform(
            kb, (1, fout), jnp.float32, minval=-bound, maxval=bound)
    return params


def anet_reference(x, p):
    h = jnp.maximum(x @ p["w1"] + p["b1"], 0.0)
    h = jnp.maximum(h @ p["w2"] + p["b2"], 0.0)
    h = jnp.maximum(h @ p["w3"] + p["b3"], 0.0)
    return jnp.tanh(h @ p["w4"] + p["b4"])


if __name__ == "__main__":
    s_dim, a_dim = 16, 8
    key = jax.random.PRNGKey(0)
    key, kp = jax.random.split(key)
    params = init_params(kp, s_dim, a_dim)

    # Small single-tile case (B=8) and a multi-tile, non-divisible case (B=300)
    # to exercise the batch grid + padding paths.
    for batch in (8, 300):
        key, kx = jax.random.split(key)
        x = jax.random.normal(kx, (batch, s_dim), jnp.float32)

        out = jax.block_until_ready(anet_forward(x, params))
        ref = anet_reference(x, params)

        assert out.shape == (batch, a_dim)
        # bf16 matmul operands -> looser tolerance vs f32 reference
        max_err = float(jnp.max(jnp.abs(out - ref)))
        assert max_err < 5e-2, f"max abs err {max_err} too large (batch={batch})"

    print("KERNEL_OK")
</pallas_src>

<mosaic_0001>
module attributes {stable_mosaic.version = 11 : i64} {
  func.func @anet_kernel(%arg0: i32, %arg1: memref<8x128xf32, #tpu.memory_space<vmem>>, %arg2: memref<128x128xbf16, #tpu.memory_space<vmem>>, %arg3: memref<1x128xf32, #tpu.memory_space<vmem>>, %arg4: memref<128x256xbf16, #tpu.memory_space<vmem>>, %arg5: memref<1x256xf32, #tpu.memory_space<vmem>>, %arg6: memref<256x128xbf16, #tpu.memory_space<vmem>>, %arg7: memref<1x128xf32, #tpu.memory_space<vmem>>, %arg8: memref<128x128xbf16, #tpu.memory_space<vmem>>, %arg9: memref<1x128xf32, #tpu.memory_space<vmem>>, %arg10: memref<8x128xf32, #tpu.memory_space<vmem>>) attributes {dimension_semantics = [#tpu.dimension_semantics<parallel>], iteration_bounds = array<i64: 1>, scalar_prefetch = 0 : i64, scratch_operands = 0 : i64, tpu.core_type = #tpu.core_type<tc>, window_params = [{transform_indices = @transform_0, window_bounds = array<i64: 8, 128>}, {pipeline_mode = #tpu.pipeline_mode<synchronous>, transform_indices = @transform_1, window_bounds = array<i64: 128, 128>}, {pipeline_mode = #tpu.pipeline_mode<synchronous>, transform_indices = @transform_2, window_bounds = array<i64: 1, 128>}, {pipeline_mode = #tpu.pipeline_mode<synchronous>, transform_indices = @transform_3, window_bounds = array<i64: 128, 256>}, {pipeline_mode = #tpu.pipeline_mode<synchronous>, transform_indices = @transform_4, window_bounds = array<i64: 1, 256>}, {pipeline_mode = #tpu.pipeline_mode<synchronous>, transform_indices = @transform_5, window_bounds = array<i64: 256, 128>}, {pipeline_mode = #tpu.pipeline_mode<synchronous>, transform_indices = @transform_6, window_bounds = array<i64: 1, 128>}, {pipeline_mode = #tpu.pipeline_mode<synchronous>, transform_indices = @transform_7, window_bounds = array<i64: 128, 128>}, {pipeline_mode = #tpu.pipeline_mode<synchronous>, transform_indices = @transform_8, window_bounds = array<i64: 1, 128>}, {transform_indices = @transform_9, window_bounds = array<i64: 8, 128>}]} {
    %c0 = arith.constant 0 : index
    %c0_0 = arith.constant 0 : index
    %0 = vector.load %arg1[%c0, %c0_0] : memref<8x128xf32, #tpu.memory_space<vmem>>, vector<8x128xf32>
    %1 = arith.truncf %0 : vector<8x128xf32> to vector<8x128xbf16>
    %c0_1 = arith.constant 0 : index
    %c0_2 = arith.constant 0 : index
    %2 = vector.load %arg2[%c0_1, %c0_2] : memref<128x128xbf16, #tpu.memory_space<vmem>>, vector<128x128xbf16>
    %cst = arith.constant dense<0.000000e+00> : vector<8x128xf32>
    %3 = tpu.matmul %1, %2, %cst {dimension_numbers = #tpu.dot_dimension_numbers<[1], [0], [0], [1], [0, 0, 1, 1], [], []>} : vector<8x128xbf16>, vector<128x128xbf16>, vector<8x128xf32> -> vector<8x128xf32>
    %c0_3 = arith.constant 0 : index
    %c0_4 = arith.constant 0 : index
    %4 = vector.load %arg3[%c0_3, %c0_4] : memref<1x128xf32, #tpu.memory_space<vmem>>, vector<1x128xf32>
    %5 = vector.broadcast %4 : vector<1x128xf32> to vector<8x128xf32>
    %6 = arith.addf %3, %5 : vector<8x128xf32>
    %cst_5 = arith.constant 0.000000e+00 : f32
    %7 = vector.broadcast %cst_5 : f32 to vector<8x128xf32>
    %8 = arith.maximumf %6, %7 : vector<8x128xf32>
    %9 = arith.truncf %8 : vector<8x128xf32> to vector<8x128xbf16>
    %c0_6 = arith.constant 0 : index
    %c0_7 = arith.constant 0 : index
    %10 = vector.load %arg4[%c0_6, %c0_7] : memref<128x256xbf16, #tpu.memory_space<vmem>>, vector<128x256xbf16>
    %cst_8 = arith.constant dense<0.000000e+00> : vector<8x256xf32>
    %11 = tpu.matmul %9, %10, %cst_8 {dimension_numbers = #tpu.dot_dimension_numbers<[1], [0], [0], [1], [0, 0, 1, 1], [], []>} : vector<8x128xbf16>, vector<128x256xbf16>, vector<8x256xf32> -> vector<8x256xf32>
    %c0_9 = arith.constant 0 : index
    %c0_10 = arith.constant 0 : index
    %12 = vector.load %arg5[%c0_9, %c0_10] : memref<1x256xf32, #tpu.memory_space<vmem>>, vector<1x256xf32>
    %13 = vector.broadcast %12 : vector<1x256xf32> to vector<8x256xf32>
    %14 = arith.addf %11, %13 : vector<8x256xf32>
    %cst_11 = arith.constant 0.000000e+00 : f32
    %15 = vector.broadcast %cst_11 : f32 to vector<8x256xf32>
    %16 = arith.maximumf %14, %15 : vector<8x256xf32>
    %17 = arith.truncf %16 : vector<8x256xf32> to vector<8x256xbf16>
    %c0_12 = arith.constant 0 : index
    %c0_13 = arith.constant 0 : index
    %18 = vector.load %arg6[%c0_12, %c0_13] : memref<256x128xbf16, #tpu.memory_space<vmem>>, vector<256x128xbf16>
    %cst_14 = arith.constant dense<0.000000e+00> : vector<8x128xf32>
    %19 = tpu.matmul %17, %18, %cst_14 {dimension_numbers = #tpu.dot_dimension_numbers<[1], [0], [0], [1], [0, 0, 1, 1], [], []>} : vector<8x256xbf16>, vector<256x128xbf16>, vector<8x128xf32> -> vector<8x128xf32>
    %c0_15 = arith.constant 0 : index
    %c0_16 = arith.constant 0 : index
    %20 = vector.load %arg7[%c0_15, %c0_16] : memref<1x128xf32, #tpu.memory_space<vmem>>, vector<1x128xf32>
    %21 = vector.broadcast %20 : vector<1x128xf32> to vector<8x128xf32>
    %22 = arith.addf %19, %21 : vector<8x128xf32>
    %cst_17 = arith.constant 0.000000e+00 : f32
    %23 = vector.broadcast %cst_17 : f32 to vector<8x128xf32>
    %24 = arith.maximumf %22, %23 : vector<8x128xf32>
    %25 = arith.truncf %24 : vector<8x128xf32> to vector<8x128xbf16>
    %c0_18 = arith.constant 0 : index
    %c0_19 = arith.constant 0 : index
    %26 = vector.load %arg8[%c0_18, %c0_19] : memref<128x128xbf16, #tpu.memory_space<vmem>>, vector<128x128xbf16>
    %cst_20 = arith.constant dense<0.000000e+00> : vector<8x128xf32>
    %27 = tpu.matmul %25, %26, %cst_20 {dimension_numbers = #tpu.dot_dimension_numbers<[1], [0], [0], [1], [0, 0, 1, 1], [], []>} : vector<8x128xbf16>, vector<128x128xbf16>, vector<8x128xf32> -> vector<8x128xf32>
    %c0_21 = arith.constant 0 : index
    %c0_22 = arith.constant 0 : index
    %28 = vector.load %arg9[%c0_21, %c0_22] : memref<1x128xf32, #tpu.memory_space<vmem>>, vector<1x128xf32>
    %29 = vector.broadcast %28 : vector<1x128xf32> to vector<8x128xf32>
    %30 = arith.addf %27, %29 : vector<8x128xf32>
    %31 = math.tanh %30 : vector<8x128xf32>
    %c0_23 = arith.constant 0 : index
    %c0_24 = arith.constant 0 : index
    %32 = vector.load %arg10[%c0_23, %c0_24] : memref<8x128xf32, #tpu.memory_space<vmem>>, vector<8x128xf32>
    tpu.vector_store %arg10[%c0_23, %c0_24], %31 {strides = array<i32>} : memref<8x128xf32, #tpu.memory_space<vmem>>, vector<8x128xf32>,
    return
  }
  func.func @transform_0(%arg0: i32) -> (i32, i32) {
    %c0_i32 = arith.constant 0 : i32
    %c0_i32_0 = arith.constant 0 : i32
    return %arg0, %c0_i32 : i32, i32
  }
  func.func @transform_1(%arg0: i32) -> (i32, i32) {
    %c0_i32 = arith.constant 0 : i32
    %c0_i32_0 = arith.constant 0 : i32
    %c0_i32_1 = arith.constant 0 : i32
    return %c0_i32, %c0_i32_0 : i32, i32
  }
  func.func @transform_2(%arg0: i32) -> (i32, i32) {
    %c0_i32 = arith.constant 0 : i32
    %c0_i32_0 = arith.constant 0 : i32
    %c0_i32_1 = arith.constant 0 : i32
    return %c0_i32, %c0_i32_0 : i32, i32
  }
  func.func @transform_3(%arg0: i32) -> (i32, i32) {
    %c0_i32 = arith.constant 0 : i32
    %c0_i32_0 = arith.constant 0 : i32
    %c0_i32_1 = arith.constant 0 : i32
    return %c0_i32, %c0_i32_0 : i32, i32
  }
  func.func @transform_4(%arg0: i32) -> (i32, i32) {
    %c0_i32 = arith.constant 0 : i32
    %c0_i32_0 = arith.constant 0 : i32
    %c0_i32_1 = arith.constant 0 : i32
    return %c0_i32, %c0_i32_0 : i32, i32
  }
  func.func @transform_5(%arg0: i32) -> (i32, i32) {
    %c0_i32 = arith.constant 0 : i32
    %c0_i32_0 = arith.constant 0 : i32
    %c0_i32_1 = arith.constant 0 : i32
    return %c0_i32, %c0_i32_0 : i32, i32
  }
  func.func @transform_6(%arg0: i32) -> (i32, i32) {
    %c0_i32 = arith.constant 0 : i32
    %c0_i32_0 = arith.constant 0 : i32
    %c0_i32_1 = arith.constant 0 : i32
    return %c0_i32, %c0_i32_0 : i32, i32
  }
  func.func @transform_7(%arg0: i32) -> (i32, i32) {
    %c0_i32 = arith.constant 0 : i32
    %c0_i32_0 = arith.constant 0 : i32
    %c0_i32_1 = arith.constant 0 : i32
    return %c0_i32, %c0_i32_0 : i32, i32
  }
  func.func @transform_8(%arg0: i32) -> (i32, i32) {
    %c0_i32 = arith.constant 0 : i32
    %c0_i32_0 = arith.constant 0 : i32
    %c0_i32_1 = arith.constant 0 : i32
    return %c0_i32, %c0_i32_0 : i32, i32
  }
  func.func @transform_9(%arg0: i32) -> (i32, i32) {
    %c0_i32 = arith.constant 0 : i32
    %c0_i32_0 = arith.constant 0 : i32
    return %arg0, %c0_i32 : i32, i32
  }
}

</mosaic_0001>

<llo_original>
// kernel: tpu_custom_call.1
$region0: #{tpu_custom_call.1}
  #allocation0 [shape = 'u32[]', space=smem, size = 0x4, offset = 0x4, fixed_abs, tag = 'smem constant byte address 0x4 - core index']
  #allocation1 [shape = 'u32[144,128]{1,0:T(1,128)}', space=vmem, size = 0x12000, scoped, tag = 'internal scratch']
  %s0 = inlined_call_operand.hbm [shape: f32[8,128], index: 0, kind: input, shape index: {}]
  %s1 = inlined_call_operand.hbm [shape: bf16[128,128], index: 1, kind: input, shape index: {}]
  %s2 = inlined_call_operand.vmem [shape: f32[1,128], index: 2, kind: input, shape index: {}]
  %s3 = inlined_call_operand.hbm [shape: bf16[128,256], index: 3, kind: input, shape index: {}]
  %s4 = inlined_call_operand.vmem [shape: f32[1,256], index: 4, kind: input, shape index: {}]
  %s5 = inlined_call_operand.hbm [shape: bf16[256,128], index: 5, kind: input, shape index: {}]
  %s6 = inlined_call_operand.vmem [shape: f32[1,128], index: 6, kind: input, shape index: {}]
  %s7 = inlined_call_operand.hbm [shape: bf16[128,128], index: 7, kind: input, shape index: {}]
  %s8 = inlined_call_operand.vmem [shape: f32[1,128], index: 8, kind: input, shape index: {}]
  %s9 = inlined_call_operand.hbm [shape: f32[8,128], index: 9, kind: output, shape index: {}]
  %s10 = sld [smem:[#allocation0]]
  $region66: #{tpu_custom_call.1} parent=0
    _
  %s12 = ssub.s32 1, %s10
  %s13 = scalar_select 0, %s12, %s10
  $region1: #{tpu_custom_call.1} parent=0
    #allocation2 [shape = 'u8[4096]{0}', space=vmem, size = 0x1000, scoped, tag = 'input window, operand 0, single buffered']
    #allocation3 [shape = 's32[1]{0}', space=sflag, size = 0x4, scoped, tag = 'scoped memory for tpu_custom_call.1']
    #allocation4 [shape = 's32[1]{0}', space=sflag, size = 0x4, scoped, tag = 'scoped memory for tpu_custom_call.1']
    #allocation5 [shape = 'u8[32768]{0}', space=vmem, size = 0x8000, scoped, tag = 'input window, operand 1, single buffered']
    #allocation6 [shape = 's32[1]{0}', space=sflag, size = 0x4, scoped, tag = 'scoped memory for tpu_custom_call.1']
    #allocation7 [shape = 'u8[65536]{0}', space=vmem, size = 0x10000, scoped, tag = 'input window, operand 3, single buffered']
    #allocation8 [shape = 'u8[65536]{0}', space=vmem, size = 0x10000, scoped, tag = 'input window, operand 5, single buffered']
    #allocation9 [shape = 's32[1]{0}', space=sflag, size = 0x4, scoped, tag = 'scoped memory for tpu_custom_call.1']
    #allocation10 [shape = 'u8[32768]{0}', space=vmem, size = 0x8000, scoped, tag = 'input window, operand 7, single buffered']
    #allocation11 [shape = 'u8[4096]{0}', space=vmem, size = 0x1000, scoped, tag = 'output window, operand 0, single buffered']
    %14 = vsyncpa [#allocation3], 0
    %15 = vsyncpa [#allocation6], 0
    %16 = vsyncpa [#allocation9], 0
    %17 = vsyncpa [#allocation4], 0
    // Predicated region
    $region2: #{tpu_custom_call.1} parent=1 // pred_check
      _
    $region3: #{tpu_custom_call.1} parent=1 // pred_check_branch
      %19 = sbr.rel (0) target = $region5
    $region4: #{tpu_custom_call.1} parent=1 // pred_region
      %s21 = ssub.s32 128, 128
      %22 = vsyncadd [#allocation3], %s21
      %s24 = sshll.u32 [#allocation2], 4
      %s25 = int_to_ptr.vmem [resolvable:$true] %s24
      %27 = dma.hbm_to_vmem [thread:$0]  %s0, 128, %s25, [#allocation3]
    $region5: #{tpu_custom_call.1} parent=1 // pred_fallthru
      _
    // Predicated region
    $region6: #{tpu_custom_call.1} parent=1 // pred_check
      _
    $region7: #{tpu_custom_call.1} parent=1 // pred_check_branch
      %29 = sbr.rel (0) target = $region9
    $region8: #{tpu_custom_call.1} parent=1 // pred_region
      %s31 = ssub.s32 1024, 1024
      %32 = vsyncadd [#allocation6], %s31
      %s33 = sshll.u32 [#allocation5], 4
      %s34 = int_to_ptr.vmem [resolvable:$true] %s33
      %39 = dma.hbm_to_vmem [thread:$0]  %s1, 1024, %s34, [#allocation6], 64, 64, 4
    $region9: #{tpu_custom_call.1} parent=1 // pred_fallthru
      _
    // Predicated region
    $region10: #{tpu_custom_call.1} parent=1 // pred_check
      _
    $region11: #{tpu_custom_call.1} parent=1 // pred_check_branch
      %41 = sbr.rel (0) target = $region13
    $region12: #{tpu_custom_call.1} parent=1 // pred_region
      _
    $region13: #{tpu_custom_call.1} parent=1 // pred_fallthru
      _
    // Predicated region
    $region14: #{tpu_custom_call.1} parent=1 // pred_check
      _
    $region15: #{tpu_custom_call.1} parent=1 // pred_check_branch
      %43 = sbr.rel (0) target = $region17
    $region16: #{tpu_custom_call.1} parent=1 // pred_region
      %s45 = ssub.s32 2048, 2048
      %46 = vsyncadd [#allocation6], %s45
      %s47 = sshll.u32 [#allocation7], 4
      %s48 = int_to_ptr.vmem [resolvable:$true] %s47
      %53 = dma.hbm_to_vmem [thread:$0]  %s3, 2048, %s48, [#allocation6], 128, 128, 8
    $region17: #{tpu_custom_call.1} parent=1 // pred_fallthru
      _
    // Predicated region
    $region18: #{tpu_custom_call.1} parent=1 // pred_check
      _
    $region19: #{tpu_custom_call.1} parent=1 // pred_check_branch
      %55 = sbr.rel (0) target = $region21
    $region20: #{tpu_custom_call.1} parent=1 // pred_region
      _
    $region21: #{tpu_custom_call.1} parent=1 // pred_fallthru
      _
    // Predicated region
    $region22: #{tpu_custom_call.1} parent=1 // pred_check
      _
    $region23: #{tpu_custom_call.1} parent=1 // pred_check_branch
      %57 = sbr.rel (0) target = $region25
    $region24: #{tpu_custom_call.1} parent=1 // pred_region
      %s59 = ssub.s32 2048, 2048
      %60 = vsyncadd [#allocation9], %s59
      %s61 = sshll.u32 [#allocation8], 4
      %s62 = int_to_ptr.vmem [resolvable:$true] %s61
      %67 = dma.hbm_to_vmem [thread:$0]  %s5, 2048, %s62, [#allocation9], 64, 64, 4
    $region25: #{tpu_custom_call.1} parent=1 // pred_fallthru
      _
    // Predicated region
    $region26: #{tpu_custom_call.1} parent=1 // pred_check
      _
    $region27: #{tpu_custom_call.1} parent=1 // pred_check_branch
      %69 = sbr.rel (0) target = $region29
    $region28: #{tpu_custom_call.1} parent=1 // pred_region
      _
    $region29: #{tpu_custom_call.1} parent=1 // pred_fallthru
      _
    // Predicated region
    $region30: #{tpu_custom_call.1} parent=1 // pred_check
      _
    $region31: #{tpu_custom_call.1} parent=1 // pred_check_branch
      %71 = sbr.rel (0) target = $region33
    $region32: #{tpu_custom_call.1} parent=1 // pred_region
      %s73 = ssub.s32 1024, 1024
      %74 = vsyncadd [#allocation9], %s73
      %s75 = sshll.u32 [#allocation10], 4
      %s76 = int_to_ptr.vmem [resolvable:$true] %s75
      %81 = dma.hbm_to_vmem [thread:$0]  %s7, 1024, %s76, [#allocation9], 64, 64, 4
    $region33: #{tpu_custom_call.1} parent=1 // pred_fallthru
      _
    // Predicated region
    $region34: #{tpu_custom_call.1} parent=1 // pred_check
      _
    $region35: #{tpu_custom_call.1} parent=1 // pred_check_branch
      %83 = sbr.rel (0) target = $region37
    $region36: #{tpu_custom_call.1} parent=1 // pred_region
      _
    $region37: #{tpu_custom_call.1} parent=1 // pred_fallthru
      _
    // Predicated region
    $region38: #{tpu_custom_call.1} parent=1 // pred_check
      _
    $region39: #{tpu_custom_call.1} parent=1 // pred_check_branch
      %85 = sbr.rel (0) target = $region41
    $region40: #{tpu_custom_call.1} parent=1 // pred_region
      %86 = dma.done [#allocation3], 128
    $region41: #{tpu_custom_call.1} parent=1 // pred_fallthru
      _
    // Predicated region
    $region42: #{tpu_custom_call.1} parent=1 // pred_check
      _
    $region43: #{tpu_custom_call.1} parent=1 // pred_check_branch
      %88 = sbr.rel (0) target = $region45
    $region44: #{tpu_custom_call.1} parent=1 // pred_region
      %89 = dma.done [#allocation6], 1024
    $region45: #{tpu_custom_call.1} parent=1 // pred_fallthru
      _
    // Predicated region
    $region46: #{tpu_custom_call.1} parent=1 // pred_check
      _
    $region47: #{tpu_custom_call.1} parent=1 // pred_check_branch
      %91 = sbr.rel (0) target = $region49
    $region48: #{tpu_custom_call.1} parent=1 // pred_region
      %92 = dma.done [#allocation6], 2048
    $region49: #{tpu_custom_call.1} parent=1 // pred_fallthru
      _
    // Predicated region
    $region50: #{tpu_custom_call.1} parent=1 // pred_check
      _
    $region51: #{tpu_custom_call.1} parent=1 // pred_check_branch
      %94 = sbr.rel (0) target = $region53
    $region52: #{tpu_custom_call.1} parent=1 // pred_region
      %95 = dma.done [#allocation9], 2048
    $region53: #{tpu_custom_call.1} parent=1 // pred_fallthru
      _
    // Predicated region
    $region54: #{tpu_custom_call.1} parent=1 // pred_check
      _
    $region55: #{tpu_custom_call.1} parent=1 // pred_check_branch
      %97 = sbr.rel (0) target = $region57
    $region56: #{tpu_custom_call.1} parent=1 // pred_region
      %98 = dma.done [#allocation9], 1024
    $region57: #{tpu_custom_call.1} parent=1 // pred_fallthru
      _
    %v100 = vld [vmem:[#allocation2] sm:$0xff]
    %v101 = vpack.c.bf16 %v100, %v100
    %v102 = vld [vmem:[#allocation5] sm:$0xf]
    %v103 = vld [vmem:[#allocation5 + $0x4] sm:$0xf]
    %v104 = vld [vmem:[#allocation5 + $0x8] sm:$0xf]
    %v105 = vld [vmem:[#allocation5 + $0xc] sm:$0xf]
    %v106 = vld [vmem:[#allocation5 + $0x10] sm:$0xf]
    %v107 = vld [vmem:[#allocation5 + $0x14] sm:$0xf]
    %v108 = vld [vmem:[#allocation5 + $0x18] sm:$0xf]
    %v109 = vld [vmem:[#allocation5 + $0x1c] sm:$0xf]
    %v110 = vld [vmem:[#allocation5 + $0x20] sm:$0xf]
    %v111 = vld [vmem:[#allocation5 + $0x24] sm:$0xf]
    %v112 = vld [vmem:[#allocation5 + $0x28] sm:$0xf]
    %v113 = vld [vmem:[#allocation5 + $0x2c] sm:$0xf]
    %v114 = vld [vmem:[#allocation5 + $0x30] sm:$0xf]
    %v115 = vld [vmem:[#allocation5 + $0x34] sm:$0xf]
    %v116 = vld [vmem:[#allocation5 + $0x38] sm:$0xf]
    %v117 = vld [vmem:[#allocation5 + $0x3c] sm:$0xf]
    %v118 = vld [vmem:[%s2] sm:$0x1]
    %v120 = vlaneseq
    %v121 = vshrl.u32 %v120, 7
    %v122 = vsub.s32 0, %v121
    %v123 = vrot.slane %v118, %v122
    %v141 = vunpack.c.l.b16 %v102
    %v142 = vunpack.c.l.b16 %v103
    %v143 = vunpack.c.l.b16 %v104
    %v144 = vunpack.c.l.b16 %v105
    %v145 = vunpack.c.l.b16 %v106
    %v146 = vunpack.c.l.b16 %v107
    %v147 = vunpack.c.l.b16 %v108
    %v148 = vunpack.c.l.b16 %v109
    %v149 = vunpack.c.l.b16 %v110
    %v150 = vunpack.c.l.b16 %v111
    %v151 = vunpack.c.l.b16 %v112
    %v152 = vunpack.c.l.b16 %v113
    %v153 = vunpack.c.l.b16 %v114
    %v154 = vunpack.c.l.b16 %v115
    %v155 = vunpack.c.l.b16 %v116
    %v156 = vunpack.c.l.b16 %v117
    %v157 = vpack.c.b16 %v142, %v141
    %v158 = vpack.c.b16 %v144, %v143
    %v159 = vpack.c.b16 %v146, %v145
    %v160 = vpack.c.b16 %v148, %v147
    %v161 = vpack.c.b16 %v150, %v149
    %v162 = vpack.c.b16 %v152, %v151
    %v163 = vpack.c.b16 %v154, %v153
    %v164 = vpack.c.b16 %v156, %v155
    %173 = vmatprep.subr.bf16.mxu0 0
    %174 = vmatpush1.bf16.msra.mxu0 %v157
    %175 = vmatprep.subr.bf16.mxu0 0
    %176 = vmatpush1.bf16.msra.mxu0 %v158
    %177 = vmatprep.subr.bf16.mxu0 0
    %178 = vmatpush1.bf16.msra.mxu0 %v159
    %179 = vmatprep.subr.bf16.mxu0 0
    %180 = vmatpush1.bf16.msra.mxu0 %v160
    %181 = vmatprep.subr.bf16.mxu0 0
    %182 = vmatpush1.bf16.msra.mxu0 %v161
    %183 = vmatprep.subr.bf16.mxu0 0
    %184 = vmatpush1.bf16.msra.mxu0 %v162
    %185 = vmatprep.subr.bf16.mxu0 0
    %186 = vmatpush1.bf16.msra.mxu0 %v163
    %187 = vmatprep.subr.bf16.mxu0 0
    %188 = vmatpush1.bf16.msra.mxu0 %v164
    %189 = vmatprep.subr.bf16.mxu0 0
    %190 = vmatpush1.bf16.msra.mxu0 0
    %191 = vmatprep.subr.bf16.mxu0 0
    %192 = vmatpush1.bf16.msra.mxu0 0
    %193 = vmatprep.subr.bf16.mxu0 0
    %194 = vmatpush1.bf16.msra.mxu0 0
    %195 = vmatprep.subr.bf16.mxu0 0
    %196 = vmatpush1.bf16.msra.mxu0 0
    %197 = vmatprep.subr.bf16.mxu0 0
    %198 = vmatpush1.bf16.msra.mxu0 0
    %199 = vmatprep.subr.bf16.mxu0 0
    %200 = vmatpush1.bf16.msra.mxu0 0
    %201 = vmatprep.subr.bf16.mxu0 0
    %202 = vmatpush1.bf16.msra.mxu0 0
    %203 = vmatprep.subr.bf16.mxu0 0
    %204 = vmatpush1.bf16.msra.mxu0 0
    %205 = vmatprep.mubr.bf16.mxu0 0
    %206 = vmatmul.mubr.bf16.gmra.mrb[0].mxu0 %v101
    %v207 = vpop.f32.mrb[0].mxu0
    %v208 = vadd.f32 %v123, %v207
    %v209 = vpop.f32.mrb[0].mxu0
    %v210 = vpop.f32.mrb[0].mxu0
    %v211 = vpop.f32.mrb[0].mxu0
    %212 = vdwg.mxu0
    %v213 = vmax.f32 %v208, 0.0
    %v214 = vpack.c.bf16 %v213, %v213
    %v215 = vld [vmem:[#allocation7] sm:$0xff]
    %v216 = vld [vmem:[#allocation7 + $0x8] sm:$0xff]
    %v217 = vld [vmem:[#allocation7 + $0x10] sm:$0xff]
    %v218 = vld [vmem:[#allocation7 + $0x18] sm:$0xff]
    %v219 = vld [vmem:[#allocation7 + $0x20] sm:$0xff]
    %v220 = vld [vmem:[#allocation7 + $0x28] sm:$0xff]
    %v221 = vld [vmem:[#allocation7 + $0x30] sm:$0xff]
    %v222 = vld [vmem:[#allocation7 + $0x38] sm:$0xff]
    %v223 = vld [vmem:[#allocation7 + $0x40] sm:$0xff]
    %v224 = vld [vmem:[#allocation7 + $0x48] sm:$0xff]
    %v225 = vld [vmem:[#allocation7 + $0x50] sm:$0xff]
    %v226 = vld [vmem:[#allocation7 + $0x58] sm:$0xff]
    %v227 = vld [vmem:[#allocation7 + $0x60] sm:$0xff]
    %v228 = vld [vmem:[#allocation7 + $0x68] sm:$0xff]
    %v229 = vld [vmem:[#allocation7 + $0x70] sm:$0xff]
    %v230 = vld [vmem:[#allocation7 + $0x78] sm:$0xff]
    %v231 = vld [vmem:[%s4] sm:$0x3]
    %v233 = vlaneseq
    %v234 = vshrl.u32 %v233, 7
    %v235 = vsub.s32 0, %v234
    %v236 = vrot.slane %v231, %v235
    %v237 = vlaneseq
    %v238 = vshrl.u32 %v237, 7
    %v239 = vsub.s32 1, %v238
    %v240 = vrot.slane %v231, %v239
    %v259 = vunpack.c.l.b16 %v215
    %v260 = vunpack.c.h.b16 %v215
    %v261 = vunpack.c.l.b16 %v216
    %v262 = vunpack.c.h.b16 %v216
    %v263 = vunpack.c.l.b16 %v217
    %v264 = vunpack.c.h.b16 %v217
    %v265 = vunpack.c.l.b16 %v218
    %v266 = vunpack.c.h.b16 %v218
    %v267 = vunpack.c.l.b16 %v219
    %v268 = vunpack.c.h.b16 %v219
    %v269 = vunpack.c.l.b16 %v220
    %v270 = vunpack.c.h.b16 %v220
    %v271 = vunpack.c.l.b16 %v221
    %v272 = vunpack.c.h.b16 %v221
    %v273 = vunpack.c.l.b16 %v222
    %v274 = vunpack.c.h.b16 %v222
    %v275 = vunpack.c.l.b16 %v223
    %v276 = vunpack.c.h.b16 %v223
    %v277 = vunpack.c.l.b16 %v224
    %v278 = vunpack.c.h.b16 %v224
    %v279 = vunpack.c.l.b16 %v225
    %v280 = vunpack.c.h.b16 %v225
    %v281 = vunpack.c.l.b16 %v226
    %v282 = vunpack.c.h.b16 %v226
    %v283 = vunpack.c.l.b16 %v227
    %v284 = vunpack.c.h.b16 %v227
    %v285 = vunpack.c.l.b16 %v228
    %v286 = vunpack.c.h.b16 %v228
    %v287 = vunpack.c.l.b16 %v229
    %v288 = vunpack.c.h.b16 %v229
    %v289 = vunpack.c.l.b16 %v230
    %v290 = vunpack.c.h.b16 %v230
    %v291 = vpack.c.b16 %v261, %v259
    %v292 = vpack.c.b16 %v262, %v260
    %v293 = vpack.c.b16 %v265, %v263
    %v294 = vpack.c.b16 %v266, %v264
    %v295 = vpack.c.b16 %v269, %v267
    %v296 = vpack.c.b16 %v270, %v268
    %v297 = vpack.c.b16 %v273, %v271
    %v298 = vpack.c.b16 %v274, %v272
    %v299 = vpack.c.b16 %v277, %v275
    %v300 = vpack.c.b16 %v278, %v276
    %v301 = vpack.c.b16 %v281, %v279
    %v302 = vpack.c.b16 %v282, %v280
    %v303 = vpack.c.b16 %v285, %v283
    %v304 = vpack.c.b16 %v286, %v284
    %v305 = vpack.c.b16 %v289, %v287
    %v306 = vpack.c.b16 %v290, %v288
    %323 = vmatprep.subr.bf16.mxu0 %v292
    %324 = vmatpush1.bf16.msra.mxu0 %v291
    %325 = vmatprep.subr.bf16.mxu0 %v294
    %326 = vmatpush1.bf16.msra.mxu0 %v293
    %327 = vmatprep.subr.bf16.mxu0 %v296
    %328 = vmatpush1.bf16.msra.mxu0 %v295
    %329 = vmatprep.subr.bf16.mxu0 %v298
    %330 = vmatpush1.bf16.msra.mxu0 %v297
    %331 = vmatprep.subr.bf16.mxu0 %v300
    %332 = vmatpush1.bf16.msra.mxu0 %v299
    %333 = vmatprep.subr.bf16.mxu0 %v302
    %334 = vmatpush1.bf16.msra.mxu0 %v301
    %335 = vmatprep.subr.bf16.mxu0 %v304
    %336 = vmatpush1.bf16.msra.mxu0 %v303
    %337 = vmatprep.subr.bf16.mxu0 %v306
    %338 = vmatpush1.bf16.msra.mxu0 %v305
    %339 = vmatprep.subr.bf16.mxu0 0
    %340 = vmatpush1.bf16.msra.mxu0 0
    %341 = vmatprep.subr.bf16.mxu0 0
    %342 = vmatpush1.bf16.msra.mxu0 0
    %343 = vmatprep.subr.bf16.mxu0 0
    %344 = vmatpush1.bf16.msra.mxu0 0
    %345 = vmatprep.subr.bf16.mxu0 0
    %346 = vmatpush1.bf16.msra.mxu0 0
    %347 = vmatprep.subr.bf16.mxu0 0
    %348 = vmatpush1.bf16.msra.mxu0 0
    %349 = vmatprep.subr.bf16.mxu0 0
    %350 = vmatpush1.bf16.msra.mxu0 0
    %351 = vmatprep.subr.bf16.mxu0 0
    %352 = vmatpush1.bf16.msra.mxu0 0
    %353 = vmatprep.subr.bf16.mxu0 0
    %354 = vmatpush1.bf16.msra.mxu0 0
    %355 = vmatprep.mubr.bf16.mxu0 0
    %356 = vmatmul.mubr.bf16.gmra.mrb[0].mxu0 %v214
    %v357 = vpop.f32.mrb[0].mxu0
    %v358 = vadd.f32 %v236, %v357
    %v359 = vpop.f32.mrb[0].mxu0
    %v360 = vadd.f32 %v240, %v359
    %v361 = vpop.f32.mrb[0].mxu0
    %v362 = vpop.f32.mrb[0].mxu0
    %363 = vdwg.mxu0
    %v364 = vmax.f32 %v358, 0.0
    %v365 = vmax.f32 %v360, 0.0
    %v366 = vpack.c.bf16 %v364, %v364
    %v367 = vpack.c.bf16 %v365, %v365
    %v368 = vld [vmem:[#allocation8] sm:$0xf]
    %v369 = vld [vmem:[#allocation8 + $0x4] sm:$0xf]
    %v370 = vld [vmem:[#allocation8 + $0x8] sm:$0xf]
    %v371 = vld [vmem:[#allocation8 + $0xc] sm:$0xf]
    %v372 = vld [vmem:[#allocation8 + $0x10] sm:$0xf]
    %v373 = vld [vmem:[#allocation8 + $0x14] sm:$0xf]
    %v374 = vld [vmem:[#allocation8 + $0x18] sm:$0xf]
    %v375 = vld [vmem:[#allocation8 + $0x1c] sm:$0xf]
    %v376 = vld [vmem:[#allocation8 + $0x20] sm:$0xf]
    %v377 = vld [vmem:[#allocation8 + $0x24] sm:$0xf]
    %v378 = vld [vmem:[#allocation8 + $0x28] sm:$0xf]
    %v379 = vld [vmem:[#allocation8 + $0x2c] sm:$0xf]
    %v380 = vld [vmem:[#allocation8 + $0x30] sm:$0xf]
    %v381 = vld [vmem:[#allocation8 + $0x34] sm:$0xf]
    %v382 = vld [vmem:[#allocation8 + $0x38] sm:$0xf]
    %v383 = vld [vmem:[#allocation8 + $0x3c] sm:$0xf]
    %v384 = vld [vmem:[#allocation8 + $0x40] sm:$0xf]
    %v385 = vld [vmem:[#allocation8 + $0x44] sm:$0xf]
    %v386 = vld [vmem:[#allocation8 + $0x48] sm:$0xf]
    %v387 = vld [vmem:[#allocation8 + $0x4c] sm:$0xf]
    %v388 = vld [vmem:[#allocation8 + $0x50] sm:$0xf]
    %v389 = vld [vmem:[#allocation8 + $0x54] sm:$0xf]
    %v390 = vld [vmem:[#allocation8 + $0x58] sm:$0xf]
    %v391 = vld [vmem:[#allocation8 + $0x5c] sm:$0xf]
    %v392 = vld [vmem:[#allocation8 + $0x60] sm:$0xf]
    %v393 = vld [vmem:[#allocation8 + $0x64] sm:$0xf]
    %v394 = vld [vmem:[#allocation8 + $0x68] sm:$0xf]
    %v395 = vld [vmem:[#allocation8 + $0x6c] sm:$0xf]
    %v396 = vld [vmem:[#allocation8 + $0x70] sm:$0xf]
    %v397 = vld [vmem:[#allocation8 + $0x74] sm:$0xf]
    %v398 = vld [vmem:[#allocation8 + $0x78] sm:$0xf]
    %v399 = vld [vmem:[#allocation8 + $0x7c] sm:$0xf]
    %v400 = vld [vmem:[%s6] sm:$0x1]
    %v402 = vlaneseq
    %v403 = vshrl.u32 %v402, 7
    %v404 = vsub.s32 0, %v403
    %v405 = vrot.slane %v400, %v404
    %v439 = vunpack.c.l.b16 %v368
    %v440 = vunpack.c.l.b16 %v369
    %v441 = vunpack.c.l.b16 %v370
    %v442 = vunpack.c.l.b16 %v371
    %v443 = vunpack.c.l.b16 %v372
    %v444 = vunpack.c.l.b16 %v373
    %v445 = vunpack.c.l.b16 %v374
    %v446 = vunpack.c.l.b16 %v375
    %v447 = vunpack.c.l.b16 %v376
    %v448 = vunpack.c.l.b16 %v377
    %v449 = vunpack.c.l.b16 %v378
    %v450 = vunpack.c.l.b16 %v379
    %v451 = vunpack.c.l.b16 %v380
    %v452 = vunpack.c.l.b16 %v381
    %v453 = vunpack.c.l.b16 %v382
    %v454 = vunpack.c.l.b16 %v383
    %v455 = vunpack.c.l.b16 %v384
    %v456 = vunpack.c.l.b16 %v385
    %v457 = vunpack.c.l.b16 %v386
    %v458 = vunpack.c.l.b16 %v387
    %v459 = vunpack.c.l.b16 %v388
    %v460 = vunpack.c.l.b16 %v389
    %v461 = vunpack.c.l.b16 %v390
    %v462 = vunpack.c.l.b16 %v391
    %v463 = vunpack.c.l.b16 %v392
    %v464 = vunpack.c.l.b16 %v393
    %v465 = vunpack.c.l.b16 %v394
    %v466 = vunpack.c.l.b16 %v395
    %v467 = vunpack.c.l.b16 %v396
    %v468 = vunpack.c.l.b16 %v397
    %v469 = vunpack.c.l.b16 %v398
    %v470 = vunpack.c.l.b16 %v399
    %v471 = vpack.c.b16 %v440, %v439
    %v472 = vpack.c.b16 %v442, %v441
    %v473 = vpack.c.b16 %v444, %v443
    %v474 = vpack.c.b16 %v446, %v445
    %v475 = vpack.c.b16 %v448, %v447
    %v476 = vpack.c.b16 %v450, %v449
    %v477 = vpack.c.b16 %v452, %v451
    %v478 = vpack.c.b16 %v454, %v453
    %v479 = vpack.c.b16 %v456, %v455
    %v480 = vpack.c.b16 %v458, %v457
    %v481 = vpack.c.b16 %v460, %v459
    %v482 = vpack.c.b16 %v462, %v461
    %v483 = vpack.c.b16 %v464, %v463
    %v484 = vpack.c.b16 %v466, %v465
    %v485 = vpack.c.b16 %v468, %v467
    %v486 = vpack.c.b16 %v470, %v469
    %503 = vmatprep.subr.bf16.mxu0 0
    %504 = vmatpush1.bf16.msra.mxu0 %v471
    %505 = vmatprep.subr.bf16.mxu0 0
    %506 = vmatpush1.bf16.msra.mxu0 %v472
    %507 = vmatprep.subr.bf16.mxu0 0
    %508 = vmatpush1.bf16.msra.mxu0 %v473
    %509 = vmatprep.subr.bf16.mxu0 0
    %510 = vmatpush1.bf16.msra.mxu0 %v474
    %511 = vmatprep.subr.bf16.mxu0 0
    %512 = vmatpush1.bf16.msra.mxu0 %v475
    %513 = vmatprep.subr.bf16.mxu0 0
    %514 = vmatpush1.bf16.msra.mxu0 %v476
    %515 = vmatprep.subr.bf16.mxu0 0
    %516 = vmatpush1.bf16.msra.mxu0 %v477
    %517 = vmatprep.subr.bf16.mxu0 0
    %518 = vmatpush1.bf16.msra.mxu0 %v478
    %519 = vmatprep.subr.bf16.mxu0 0
    %520 = vmatpush1.bf16.msra.mxu0 %v479
    %521 = vmatprep.subr.bf16.mxu0 0
    %522 = vmatpush1.bf16.msra.mxu0 %v480
    %523 = vmatprep.subr.bf16.mxu0 0
    %524 = vmatpush1.bf16.msra.mxu0 %v481
    %525 = vmatprep.subr.bf16.mxu0 0
    %526 = vmatpush1.bf16.msra.mxu0 %v482
    %527 = vmatprep.subr.bf16.mxu0 0
    %528 = vmatpush1.bf16.msra.mxu0 %v483
    %529 = vmatprep.subr.bf16.mxu0 0
    %530 = vmatpush1.bf16.msra.mxu0 %v484
    %531 = vmatprep.subr.bf16.mxu0 0
    %532 = vmatpush1.bf16.msra.mxu0 %v485
    %533 = vmatprep.subr.bf16.mxu0 0
    %534 = vmatpush1.bf16.msra.mxu0 %v486
    %535 = vmatprep.mubr.bf16.mxu0 %v367
    %536 = vmatmul.mubr.bf16.gmra.mrb[0].mxu0 %v366
    %v537 = vpop.f32.mrb[0].mxu0
    %v538 = vadd.f32 %v405, %v537
    %v539 = vpop.f32.mrb[0].mxu0
    %v540 = vpop.f32.mrb[0].mxu0
    %v541 = vpop.f32.mrb[0].mxu0
    %542 = vdwg.mxu0
    %v543 = vmax.f32 %v538, 0.0
    %v544 = vpack.c.bf16 %v543, %v543
    %v545 = vld [vmem:[#allocation10] sm:$0xf]
    %v546 = vld [vmem:[#allocation10 + $0x4] sm:$0xf]
    %v547 = vld [vmem:[#allocation10 + $0x8] sm:$0xf]
    %v548 = vld [vmem:[#allocation10 + $0xc] sm:$0xf]
    %v549 = vld [vmem:[#allocation10 + $0x10] sm:$0xf]
    %v550 = vld [vmem:[#allocation10 + $0x14] sm:$0xf]
    %v551 = vld [vmem:[#allocation10 + $0x18] sm:$0xf]
    %v552 = vld [vmem:[#allocation10 + $0x1c] sm:$0xf]
    %v553 = vld [vmem:[#allocation10 + $0x20] sm:$0xf]
    %v554 = vld [vmem:[#allocation10 + $0x24] sm:$0xf]
    %v555 = vld [vmem:[#allocation10 + $0x28] sm:$0xf]
    %v556 = vld [vmem:[#allocation10 + $0x2c] sm:$0xf]
    %v557 = vld [vmem:[#allocation10 + $0x30] sm:$0xf]
    %v558 = vld [vmem:[#allocation10 + $0x34] sm:$0xf]
    %v559 = vld [vmem:[#allocation10 + $0x38] sm:$0xf]
    %v560 = vld [vmem:[#allocation10 + $0x3c] sm:$0xf]
    %v561 = vld [vmem:[%s8] sm:$0x1]
    %v563 = vlaneseq
    %v564 = vshrl.u32 %v563, 7
    %v565 = vsub.s32 0, %v564
    %v566 = vrot.slane %v561, %v565
    %v584 = vunpack.c.l.b16 %v545
    %v585 = vunpack.c.l.b16 %v546
    %v586 = vunpack.c.l.b16 %v547
    %v587 = vunpack.c.l.b16 %v548
    %v588 = vunpack.c.l.b16 %v549
    %v589 = vunpack.c.l.b16 %v550
    %v590 = vunpack.c.l.b16 %v551
    %v591 = vunpack.c.l.b16 %v552
    %v592 = vunpack.c.l.b16 %v553
    %v593 = vunpack.c.l.b16 %v554
    %v594 = vunpack.c.l.b16 %v555
    %v595 = vunpack.c.l.b16 %v556
    %v596 = vunpack.c.l.b16 %v557
    %v597 = vunpack.c.l.b16 %v558
    %v598 = vunpack.c.l.b16 %v559
    %v599 = vunpack.c.l.b16 %v560
    %v600 = vpack.c.b16 %v585, %v584
    %v601 = vpack.c.b16 %v587, %v586
    %v602 = vpack.c.b16 %v589, %v588
    %v603 = vpack.c.b16 %v591, %v590
    %v604 = vpack.c.b16 %v593, %v592
    %v605 = vpack.c.b16 %v595, %v594
    %v606 = vpack.c.b16 %v597, %v596
    %v607 = vpack.c.b16 %v599, %v598
    %616 = vmatprep.subr.bf16.mxu0 0
    %617 = vmatpush1.bf16.msra.mxu0 %v600
    %618 = vmatprep.subr.bf16.mxu0 0
    %619 = vmatpush1.bf16.msra.mxu0 %v601
    %620 = vmatprep.subr.bf16.mxu0 0
    %621 = vmatpush1.bf16.msra.mxu0 %v602
    %622 = vmatprep.subr.bf16.mxu0 0
    %623 = vmatpush1.bf16.msra.mxu0 %v603
    %624 = vmatprep.subr.bf16.mxu0 0
    %625 = vmatpush1.bf16.msra.mxu0 %v604
    %626 = vmatprep.subr.bf16.mxu0 0
    %627 = vmatpush1.bf16.msra.mxu0 %v605
    %628 = vmatprep.subr.bf16.mxu0 0
    %629 = vmatpush1.bf16.msra.mxu0 %v606
    %630 = vmatprep.subr.bf16.mxu0 0
    %631 = vmatpush1.bf16.msra.mxu0 %v607
    %632 = vmatprep.subr.bf16.mxu0 0
    %633 = vmatpush1.bf16.msra.mxu0 0
    %634 = vmatprep.subr.bf16.mxu0 0
    %635 = vmatpush1.bf16.msra.mxu0 0
    %636 = vmatprep.subr.bf16.mxu0 0
    %637 = vmatpush1.bf16.msra.mxu0 0
    %638 = vmatprep.subr.bf16.mxu0 0
    %639 = vmatpush1.bf16.msra.mxu0 0
    %640 = vmatprep.subr.bf16.mxu0 0
    %641 = vmatpush1.bf16.msra.mxu0 0
    %642 = vmatprep.subr.bf16.mxu0 0
    %643 = vmatpush1.bf16.msra.mxu0 0
    %644 = vmatprep.subr.bf16.mxu0 0
    %645 = vmatpush1.bf16.msra.mxu0 0
    %646 = vmatprep.subr.bf16.mxu0 0
    %647 = vmatpush1.bf16.msra.mxu0 0
    %648 = vmatprep.mubr.bf16.mxu0 0
    %649 = vmatmul.mubr.bf16.gmra.mrb[0].mxu0 %v544
    %v650 = vpop.f32.mrb[0].mxu0
    %v651 = vadd.f32 %v566, %v650
    %v652 = vpop.f32.mrb[0].mxu0
    %v653 = vpop.f32.mrb[0].mxu0
    %v654 = vpop.f32.mrb[0].mxu0
    %655 = vdwg.mxu0
    %v656 = vtanh.pop %v651
    %657 = vst [vmem:[#allocation11] sm:$0xff] %v656
    // Predicated region
    $region58: #{tpu_custom_call.1} parent=1 // pred_check
      _
    $region59: #{tpu_custom_call.1} parent=1 // pred_check_branch
      %659 = sbr.rel (0) target = $region61
    $region60: #{tpu_custom_call.1} parent=1 // pred_region
      %s661 = ssub.s32 128, 128
      %662 = vsyncadd [#allocation4], %s661
      %s664 = sshll.u32 [#allocation11], 4
      %s665 = int_to_ptr.vmem [resolvable:$true] %s664
      %667 = dma.vmem_to_hbm [thread:$0]  %s665, 128, %s9, [#allocation4]
    $region61: #{tpu_custom_call.1} parent=1 // pred_fallthru
      _
    // Predicated region
    $region62: #{tpu_custom_call.1} parent=1 // pred_check
      _
    $region63: #{tpu_custom_call.1} parent=1 // pred_check_branch
      %669 = sbr.rel (0) target = $region65
    $region64: #{tpu_custom_call.1} parent=1 // pred_region
      %670 = dma.done [#allocation4], 128
    $region65: #{tpu_custom_call.1} parent=1 // pred_fallthru
      _
    %671 = vsyncpa [#allocation3], 1
    %672 = vsyncpa [#allocation6], 1
    %673 = vsyncpa [#allocation9], 1
    %674 = vsyncpa [#allocation4], 1

</llo_original>
